<compile_context>
chip_gen: v6e
topology: v6e:2x2x1
jax: 0.10.0
libtpu: 0.0.40
codegen_flags: <defaults>
</compile_context>

<pallas_src>
import functools

import jax
import jax.numpy as jnp
from jax import lax
from jax.experimental import pallas as pl
from jax.experimental.pallas import tpu as pltpu


def _linear_kernel(x_ref, w_ref, b_ref, o_ref):
    """One (tm, O) output tile: full-K matmul on the MXU + bias epilogue."""
    # x_ref: (tm, K), w_ref: (O, K) native nn.Linear layout, b_ref: (1, O)
    y = lax.dot_general(
        x_ref[...],
        w_ref[...],
        dimension_numbers=(((1,), (1,)), ((), ())),   # x @ w.T
        preferred_element_type=jnp.float32,
    )
    o_ref[...] = (y + b_ref[...]).astype(o_ref.dtype)


def _round_up(n, m):
    return ((n + m - 1) // m) * m


@functools.partial(jax.jit, static_argnames=("tm",))
def context_remover_forward(x, w, b, *, tm=256):
    """y = x @ w.T + b  (nn.Linear forward).

    x: (N, in_features)
    w: (out_features, in_features)   -- PyTorch nn.Linear weight layout
    b: (out_features,)
    """
    N, K = x.shape
    O, K2 = w.shape
    assert K == K2, "in_features mismatch"

    # Row tile: a single block for small batches, otherwise tiles of `tm`.
    if N <= tm:
        tm_eff = _round_up(max(N, 8), 8)
    else:
        tm_eff = tm
    n_pad = _round_up(N, tm_eff)

    x_p = x if n_pad == N else jnp.pad(x, ((0, n_pad - N), (0, 0)))
    b2 = b.reshape(1, O)

    grid = (n_pad // tm_eff,)

    bytes_accessed = (
        n_pad * K * x.dtype.itemsize          # x streamed once
        + O * K * w.dtype.itemsize            # weight resident (one load)
        + O * b.dtype.itemsize                # bias
        + n_pad * O * x.dtype.itemsize        # output writeback
    )

    out = pl.pallas_call(
        _linear_kernel,
        out_shape=jax.ShapeDtypeStruct((n_pad, O), x.dtype),
        grid_spec=pltpu.PrefetchScalarGridSpec(
            num_scalar_prefetch=0,
            grid=grid,
            in_specs=[
                pl.BlockSpec((tm_eff, K), lambda i: (i, 0)),  # streamed x tile
                pl.BlockSpec((O, K), lambda i: (0, 0)),       # resident weight
                pl.BlockSpec((1, O), lambda i: (0, 0)),       # resident bias
            ],
            out_specs=pl.BlockSpec((tm_eff, O), lambda i: (i, 0)),
        ),
        compiler_params=pltpu.CompilerParams(
            # Single N grid axis, independent blocks -> shardable across TCs.
            dimension_semantics=("parallel",),
        ),
        cost_estimate=pl.CostEstimate(
            flops=2 * n_pad * K * O,
            transcendentals=0,
            bytes_accessed=bytes_accessed,
        ),
    )(x_p, w, b2)

    return out[:N] if n_pad != N else out


if __name__ == "__main__":
    # Small synthetic shapes consistent with the module:
    # box_head_out_channels = 128 -> in_features = 256, out_features = 128.
    # batch = 20 (not a multiple of 8) exercises the padded-row path.
    box_head_out_channels = 128
    in_features = box_head_out_channels * 2
    out_features = box_head_out_channels
    batch = 20

    key = jax.random.PRNGKey(0)
    kx, kw, kb = jax.random.split(key, 3)

    x = jax.random.normal(kx, (batch, in_features), dtype=jnp.float32)
    # Deterministic synthetic nn.Linear parameters (same shapes as __init__).
    bound = 1.0 / (in_features ** 0.5)
    w = jax.random.uniform(kw, (out_features, in_features),
                           minval=-bound, maxval=bound, dtype=jnp.float32)
    b = jax.random.uniform(kb, (out_features,),
                           minval=-bound, maxval=bound, dtype=jnp.float32)

    y = context_remover_forward(x, w, b)
    y = jax.block_until_ready(y)

    # Reference check against plain JAX linear.
    y_ref = x @ w.T + b
    assert y.shape == (batch, out_features)
    assert jnp.allclose(y, y_ref, atol=1e-4, rtol=1e-4)

    print("KERNEL_OK")
</pallas_src>

<mosaic_0001>
module attributes {stable_mosaic.version = 11 : i64} {
  func.func @_linear_kernel(%arg0: i32, %arg1: memref<24x256xf32, #tpu.memory_space<vmem>>, %arg2: memref<128x256xf32, #tpu.memory_space<vmem>>, %arg3: memref<1x128xf32, #tpu.memory_space<vmem>>, %arg4: memref<24x128xf32, #tpu.memory_space<vmem>>) attributes {dimension_semantics = [#tpu.dimension_semantics<parallel>], iteration_bounds = array<i64: 1>, scalar_prefetch = 0 : i64, scratch_operands = 0 : i64, tpu.core_type = #tpu.core_type<tc>, window_params = [{transform_indices = @transform_0, window_bounds = array<i64: 24, 256>}, {pipeline_mode = #tpu.pipeline_mode<synchronous>, transform_indices = @transform_1, window_bounds = array<i64: 128, 256>}, {pipeline_mode = #tpu.pipeline_mode<synchronous>, transform_indices = @transform_2, window_bounds = array<i64: 1, 128>}, {transform_indices = @transform_3, window_bounds = array<i64: 24, 128>}]} {
    %c0 = arith.constant 0 : index
    %c0_0 = arith.constant 0 : index
    %0 = vector.load %arg1[%c0, %c0_0] : memref<24x256xf32, #tpu.memory_space<vmem>>, vector<24x256xf32>
    %c0_1 = arith.constant 0 : index
    %c0_2 = arith.constant 0 : index
    %1 = vector.load %arg2[%c0_1, %c0_2] : memref<128x256xf32, #tpu.memory_space<vmem>>, vector<128x256xf32>
    %cst = arith.constant dense<0.000000e+00> : vector<24x128xf32>
    %2 = tpu.matmul %0, %1, %cst {dimension_numbers = #tpu.dot_dimension_numbers<[1], [1], [0], [0], [0, 0, 1, 0], [], []>} : vector<24x256xf32>, vector<128x256xf32>, vector<24x128xf32> -> vector<24x128xf32>
    %c0_3 = arith.constant 0 : index
    %c0_4 = arith.constant 0 : index
    %3 = vector.load %arg3[%c0_3, %c0_4] : memref<1x128xf32, #tpu.memory_space<vmem>>, vector<1x128xf32>
    %4 = vector.broadcast %3 : vector<1x128xf32> to vector<24x128xf32>
    %5 = arith.addf %2, %4 : vector<24x128xf32>
    %c0_5 = arith.constant 0 : index
    %c0_6 = arith.constant 0 : index
    %6 = vector.load %arg4[%c0_5, %c0_6] : memref<24x128xf32, #tpu.memory_space<vmem>>, vector<24x128xf32>
    tpu.vector_store %arg4[%c0_5, %c0_6], %5 {strides = array<i32>} : memref<24x128xf32, #tpu.memory_space<vmem>>, vector<24x128xf32>,
    return
  }
  func.func @transform_0(%arg0: i32) -> (i32, i32) {
    %c0_i32 = arith.constant 0 : i32
    %c0_i32_0 = arith.constant 0 : i32
    return %arg0, %c0_i32 : i32, i32
  }
  func.func @transform_1(%arg0: i32) -> (i32, i32) {
    %c0_i32 = arith.constant 0 : i32
    %c0_i32_0 = arith.constant 0 : i32
    %c0_i32_1 = arith.constant 0 : i32
    return %c0_i32, %c0_i32_0 : i32, i32
  }
  func.func @transform_2(%arg0: i32) -> (i32, i32) {
    %c0_i32 = arith.constant 0 : i32
    %c0_i32_0 = arith.constant 0 : i32
    %c0_i32_1 = arith.constant 0 : i32
    return %c0_i32, %c0_i32_0 : i32, i32
  }
  func.func @transform_3(%arg0: i32) -> (i32, i32) {
    %c0_i32 = arith.constant 0 : i32
    %c0_i32_0 = arith.constant 0 : i32
    return %arg0, %c0_i32 : i32, i32
  }
}

</mosaic_0001>

<llo_original>
// kernel: context_remover_forward.1
$region0: #{context_remover_forward.1}
  #allocation0 [shape = 'u32[]', space=smem, size = 0x4, offset = 0x4, fixed_abs, tag = 'smem constant byte address 0x4 - core index']
  #allocation1 [shape = 'u32[144,128]{1,0:T(1,128)}', space=vmem, size = 0x12000, scoped, tag = 'internal scratch']
  %s0 = inlined_call_operand.vmem [shape: f32[24,256], index: 0, kind: input, shape index: {}]
  %s1 = inlined_call_operand.hbm [shape: f32[128,256], index: 1, kind: input, shape index: {}]
  %s2 = inlined_call_operand.vmem [shape: f32[1,128], index: 2, kind: input, shape index: {}]
  %s3 = inlined_call_operand.hbm [shape: f32[24,128], index: 3, kind: output, shape index: {}]
  %s4 = sld [smem:[#allocation0]]
  $region26: #{context_remover_forward.1} parent=0
    _
  %s6 = ssub.s32 1, %s4
  %s7 = scalar_select 0, %s6, %s4
  $region1: #{context_remover_forward.1} parent=0
    #allocation2 [shape = 'u8[131072]{0}', space=vmem, size = 0x20000, scoped, tag = 'input window, operand 1, single buffered']
    #allocation3 [shape = 's32[1]{0}', space=sflag, size = 0x4, scoped, tag = 'scoped memory for context_remover_forward.1']
    #allocation4 [shape = 's32[1]{0}', space=sflag, size = 0x4, scoped, tag = 'scoped memory for context_remover_forward.1']
    #allocation5 [shape = 'u8[12288]{0}', space=vmem, size = 0x3000, scoped, tag = 'output window, operand 0, single buffered']
    %8 = vsyncpa [#allocation3], 0
    %9 = vsyncpa [#allocation4], 0
    // Predicated region
    $region2: #{context_remover_forward.1} parent=1 // pred_check
      _
    $region3: #{context_remover_forward.1} parent=1 // pred_check_branch
      %11 = sbr.rel (0) target = $region5
    $region4: #{context_remover_forward.1} parent=1 // pred_region
      _
    $region5: #{context_remover_forward.1} parent=1 // pred_fallthru
      _
    // Predicated region
    $region6: #{context_remover_forward.1} parent=1 // pred_check
      _
    $region7: #{context_remover_forward.1} parent=1 // pred_check_branch
      %13 = sbr.rel (0) target = $region9
    $region8: #{context_remover_forward.1} parent=1 // pred_region
      %s15 = ssub.s32 4096, 4096
      %16 = vsyncadd [#allocation3], %s15
      %s17 = sshll.u32 [#allocation2], 4
      %s18 = int_to_ptr.vmem [resolvable:$true] %s17
      %23 = dma.hbm_to_vmem [thread:$0]  %s1, 4096, %s18, [#allocation3], 256, 256, 16
    $region9: #{context_remover_forward.1} parent=1 // pred_fallthru
      _
    // Predicated region
    $region10: #{context_remover_forward.1} parent=1 // pred_check
      _
    $region11: #{context_remover_forward.1} parent=1 // pred_check_branch
      %25 = sbr.rel (0) target = $region13
    $region12: #{context_remover_forward.1} parent=1 // pred_region
      _
    $region13: #{context_remover_forward.1} parent=1 // pred_fallthru
      _
    // Predicated region
    $region14: #{context_remover_forward.1} parent=1 // pred_check
      _
    $region15: #{context_remover_forward.1} parent=1 // pred_check_branch
      %27 = sbr.rel (0) target = $region17
    $region16: #{context_remover_forward.1} parent=1 // pred_region
      %28 = dma.done [#allocation3], 4096
    $region17: #{context_remover_forward.1} parent=1 // pred_fallthru
      _
    %v29 = vld [vmem:[%s0] sm:$0xff]
    %v30 = vld [vmem:[%s0 + $0x8] sm:$0xff]
    %v31 = vld [vmem:[%s0 + $0x10] sm:$0xff]
    %v32 = vld [vmem:[%s0 + $0x18] sm:$0xff]
    %v33 = vld [vmem:[%s0 + $0x20] sm:$0xff]
    %v34 = vld [vmem:[%s0 + $0x28] sm:$0xff]
    %v35 = vld [vmem:[#allocation2] sm:$0xff]
    %v36 = vld [vmem:[#allocation2 + $0x8] sm:$0xff]
    %v37 = vld [vmem:[#allocation2 + $0x10] sm:$0xff]
    %v38 = vld [vmem:[#allocation2 + $0x18] sm:$0xff]
    %v39 = vld [vmem:[#allocation2 + $0x20] sm:$0xff]
    %v40 = vld [vmem:[#allocation2 + $0x28] sm:$0xff]
    %v41 = vld [vmem:[#allocation2 + $0x30] sm:$0xff]
    %v42 = vld [vmem:[#allocation2 + $0x38] sm:$0xff]
    %v43 = vld [vmem:[#allocation2 + $0x40] sm:$0xff]
    %v44 = vld [vmem:[#allocation2 + $0x48] sm:$0xff]
    %v45 = vld [vmem:[#allocation2 + $0x50] sm:$0xff]
    %v46 = vld [vmem:[#allocation2 + $0x58] sm:$0xff]
    %v47 = vld [vmem:[#allocation2 + $0x60] sm:$0xff]
    %v48 = vld [vmem:[#allocation2 + $0x68] sm:$0xff]
    %v49 = vld [vmem:[#allocation2 + $0x70] sm:$0xff]
    %v50 = vld [vmem:[#allocation2 + $0x78] sm:$0xff]
    %v51 = vld [vmem:[#allocation2 + $0x80] sm:$0xff]
    %v52 = vld [vmem:[#allocation2 + $0x88] sm:$0xff]
    %v53 = vld [vmem:[#allocation2 + $0x90] sm:$0xff]
    %v54 = vld [vmem:[#allocation2 + $0x98] sm:$0xff]
    %v55 = vld [vmem:[#allocation2 + $0xa0] sm:$0xff]
    %v56 = vld [vmem:[#allocation2 + $0xa8] sm:$0xff]
    %v57 = vld [vmem:[#allocation2 + $0xb0] sm:$0xff]
    %v58 = vld [vmem:[#allocation2 + $0xb8] sm:$0xff]
    %v59 = vld [vmem:[#allocation2 + $0xc0] sm:$0xff]
    %v60 = vld [vmem:[#allocation2 + $0xc8] sm:$0xff]
    %v61 = vld [vmem:[#allocation2 + $0xd0] sm:$0xff]
    %v62 = vld [vmem:[#allocation2 + $0xd8] sm:$0xff]
    %v63 = vld [vmem:[#allocation2 + $0xe0] sm:$0xff]
    %v64 = vld [vmem:[#allocation2 + $0xe8] sm:$0xff]
    %v65 = vld [vmem:[#allocation2 + $0xf0] sm:$0xff]
    %v66 = vld [vmem:[#allocation2 + $0xf8] sm:$0xff]
    %v67 = vld [vmem:[%s2] sm:$0x1]
    %v69 = vlaneseq
    %v70 = vshrl.u32 %v69, 7
    %v71 = vsub.s32 0, %v70
    %v72 = vrot.slane %v67, %v71
    %74 = vmatprep.subr.mxu0 %v66
    %75 = vmatpush1.xpose.msra.mxu0 %v65
    %76 = vmatprep.subr.mxu0 %v64
    %77 = vmatpush1.xpose.msra.mxu0 %v63
    %78 = vmatprep.subr.mxu0 %v62
    %79 = vmatpush1.xpose.msra.mxu0 %v61
    %80 = vmatprep.subr.mxu0 %v60
    %81 = vmatpush1.xpose.msra.mxu0 %v59
    %82 = vmatprep.subr.mxu0 %v58
    %83 = vmatpush1.xpose.msra.mxu0 %v57
    %84 = vmatprep.subr.mxu0 %v56
    %85 = vmatpush1.xpose.msra.mxu0 %v55
    %86 = vmatprep.subr.mxu0 %v54
    %87 = vmatpush1.xpose.msra.mxu0 %v53
    %88 = vmatprep.subr.mxu0 %v52
    %89 = vmatpush1.xpose.msra.mxu0 %v51
    %90 = vmatprep.subr.mxu0 %v50
    %91 = vmatpush1.xpose.msra.mxu0 %v49
    %92 = vmatprep.subr.mxu0 %v48
    %93 = vmatpush1.xpose.msra.mxu0 %v47
    %94 = vmatprep.subr.mxu0 %v46
    %95 = vmatpush1.xpose.msra.mxu0 %v45
    %96 = vmatprep.subr.mxu0 %v44
    %97 = vmatpush1.xpose.msra.mxu0 %v43
    %98 = vmatprep.subr.mxu0 %v42
    %99 = vmatpush1.xpose.msra.mxu0 %v41
    %100 = vmatprep.subr.mxu0 %v40
    %101 = vmatpush1.xpose.msra.mxu0 %v39
    %102 = vmatprep.subr.mxu0 %v38
    %103 = vmatpush1.xpose.msra.mxu0 %v37
    %104 = vmatprep.subr.mxu0 %v36
    %105 = vmatpush1.xpose.msra.mxu0 %v35
    %106 = vmatprep.subr.mxu0 0.0
    %107 = vmatpush2.xpose.msra.mxu0 0.0
    %108 = vmatprep.subr.mxu0 0.0
    %109 = vmatpush2.xpose.msra.mxu0 0.0
    %110 = vmatprep.subr.mxu0 0.0
    %111 = vmatpush2.xpose.msra.mxu0 0.0
    %112 = vmatprep.subr.mxu0 0.0
    %113 = vmatpush2.xpose.msra.mxu0 0.0
    %114 = vmatprep.subr.mxu0 0.0
    %115 = vmatpush2.xpose.msra.mxu0 0.0
    %116 = vmatprep.subr.mxu0 0.0
    %117 = vmatpush2.xpose.msra.mxu0 0.0
    %118 = vmatprep.subr.mxu0 0.0
    %119 = vmatpush2.xpose.msra.mxu0 0.0
    %120 = vmatprep.subr.mxu0 0.0
    %121 = vmatpush2.xpose.msra.mxu0 0.0
    %122 = vmatprep.subr.mxu0 0.0
    %123 = vmatpush2.xpose.msra.mxu0 0.0
    %124 = vmatprep.subr.mxu0 0.0
    %125 = vmatpush2.xpose.msra.mxu0 0.0
    %126 = vmatprep.subr.mxu0 0.0
    %127 = vmatpush2.xpose.msra.mxu0 0.0
    %128 = vmatprep.subr.mxu0 0.0
    %129 = vmatpush2.xpose.msra.mxu0 0.0
    %130 = vmatprep.subr.mxu0 0.0
    %131 = vmatpush2.xpose.msra.mxu0 0.0
    %132 = vmatprep.subr.mxu0 0.0
    %133 = vmatpush2.xpose.msra.mxu0 0.0
    %134 = vmatprep.subr.mxu0 0.0
    %135 = vmatpush2.xpose.msra.mxu0 0.0
    %136 = vmatprep.subr.mxu0 0.0
    %137 = vmatpush2.xpose.msra.mxu0 0.0
    %138 = vmatprep.mubr.f32.mxu0 %v30
    %139 = vmatmul.mubr.f32.gmra.mxu0 %v29
    %v140 = vpop.f32.mrf.mxu0
    %v141 = vadd.f32 %v72, %v140
    %v142 = vpop.f32.mrf.mxu0
    %143 = vmatprep.mubr.f32.mxu0 %v32
    %144 = vmatmul.mubr.f32.gmra.mxu0 %v31
    %v145 = vpop.f32.mrf.mxu0
    %v146 = vadd.f32 %v72, %v145
    %v147 = vpop.f32.mrf.mxu0
    %148 = vmatprep.mubr.f32.mxu0 %v34
    %149 = vmatmul.mubr.f32.gmra.mxu0 %v33
    %v150 = vpop.f32.mrf.mxu0
    %v151 = vadd.f32 %v72, %v150
    %v152 = vpop.f32.mrf.mxu0
    %153 = vdwg.mxu0
    %154 = vst [vmem:[#allocation5] sm:$0xff] %v141
    %155 = vst [vmem:[#allocation5 + $0x8] sm:$0xff] %v146
    %156 = vst [vmem:[#allocation5 + $0x10] sm:$0xff] %v151
    // Predicated region
    $region18: #{context_remover_forward.1} parent=1 // pred_check
      _
    $region19: #{context_remover_forward.1} parent=1 // pred_check_branch
      %158 = sbr.rel (0) target = $region21
    $region20: #{context_remover_forward.1} parent=1 // pred_region
      %s160 = ssub.s32 384, 384
      %161 = vsyncadd [#allocation4], %s160
      %s162 = sshll.u32 [#allocation5], 4
      %s163 = int_to_ptr.vmem [resolvable:$true] %s162
      %168 = dma.vmem_to_hbm [thread:$0]  %s163, 384, %s3, [#allocation4], 128, 128, 8
    $region21: #{context_remover_forward.1} parent=1 // pred_fallthru
      _
    // Predicated region
    $region22: #{context_remover_forward.1} parent=1 // pred_check
      _
    $region23: #{context_remover_forward.1} parent=1 // pred_check_branch
      %170 = sbr.rel (0) target = $region25
    $region24: #{context_remover_forward.1} parent=1 // pred_region
      %171 = dma.done [#allocation4], 384
    $region25: #{context_remover_forward.1} parent=1 // pred_fallthru
      _
    %172 = vsyncpa [#allocation3], 1
    %173 = vsyncpa [#allocation4], 1

</llo_original>
